<compile_context>
chip_gen: v7x
topology: tpu7x:2x2x1
jax: 0.10.0
libtpu: 0.0.40
codegen_flags: <defaults>
</compile_context>

<pallas_src>
import numpy as np
import jax
import jax.numpy as jnp
from jax import lax
from jax.experimental import pallas as pl
from jax.experimental.pallas import tpu as pltpu

_VMEM_LIMIT = 48 * 1024 * 1024  # safe on v5e/v6e (128 MiB) and v7x (64 MiB)


def _round_up(x, m):
    return (x + m - 1) // m * m


def _sigmoid(x):
    # tanh form: single EUP op + cheap VPU ops, numerically stable.
    return 0.5 * jnp.tanh(0.5 * x) + 0.5


def _pick_row_tile(n):
    for cand in (512, 256, 128, 64, 32, 16, 8):
        if n % cand == 0:
            return cand
    return n


def _pick_batch_tile(bp):
    # >=2 batch tiles when possible so v7x's two TensorCores each take half.
    if bp <= 8:
        return bp
    half = (bp // 2) // 8 * 8
    return half if half >= 8 and bp % half == 0 else 8


# --------------------- hoisted input projection kernel -----------------------

def _gates_proj_kernel(x_ref, w_ref, b_ref, o_ref):
    x = x_ref[...].astype(jnp.bfloat16)                     # (Rt, Dp) bf16
    o_ref[...] = (jnp.dot(x, w_ref[...], preferred_element_type=jnp.float32)
                  + b_ref[...])                             # (Rt, 4Hp) f32


def gates_proj_pallas(x_tbd, wih_t, bias):
    """x_tbd: (T, Bp, Dp) f32;  wih_t: (Dp, 4Hp) bf16;  bias: (1, 4Hp) f32."""
    T, Bp, Dp = x_tbd.shape
    G = wih_t.shape[1]
    N = T * Bp
    Rt = _pick_row_tile(N)
    x_flat = x_tbd.reshape(N, Dp)
    out = pl.pallas_call(
        _gates_proj_kernel,
        out_shape=jax.ShapeDtypeStruct((N, G), jnp.float32),
        grid=(N // Rt,),
        in_specs=[
            pl.BlockSpec((Rt, Dp), lambda i: (i, 0)),
            pl.BlockSpec((Dp, G), lambda i: (0, 0)),
            pl.BlockSpec((1, G), lambda i: (0, 0)),
        ],
        out_specs=pl.BlockSpec((Rt, G), lambda i: (i, 0)),
        compiler_params=pltpu.CompilerParams(
            dimension_semantics=("parallel",),
            vmem_limit_bytes=_VMEM_LIMIT),
    )(x_flat, wih_t, bias)
    return out.reshape(T, Bp, G)


# --------------------------- recurrence kernel --------------------------------

def _lstm_recurrence_kernel(xproj_ref, whh_ref, mask_ref, out_ref):
    T, Bt, G = xproj_ref.shape
    Hp = whh_ref.shape[0]

    def step(t, carry):
        h, c = carry
        gates = xproj_ref[t] + jnp.dot(h.astype(jnp.bfloat16), whh_ref[...],
                                       preferred_element_type=jnp.float32)
        i = _sigmoid(gates[:, 0 * Hp:1 * Hp])
        f = _sigmoid(gates[:, 1 * Hp:2 * Hp])
        g = jnp.tanh(gates[:, 2 * Hp:3 * Hp])
        o = _sigmoid(gates[:, 3 * Hp:4 * Hp])
        c_new = f * c + i * g
        h_new = o * jnp.tanh(c_new)
        # packed-sequence semantics: zero outputs past each sequence length.
        out_ref[t] = h_new * mask_ref[t]
        return h_new, c_new

    zeros = jnp.zeros((Bt, Hp), jnp.float32)
    lax.fori_loop(0, T, step, (zeros, zeros), unroll=(T <= 16))


def lstm_recurrence_pallas(xproj, whh_t, mask):
    """xproj: (T, Bp, 4Hp) f32;  whh_t: (Hp, 4Hp) bf16;  mask: (T, Bp, 1) f32."""
    T, Bp, G = xproj.shape
    Hp = whh_t.shape[0]
    Bt = _pick_batch_tile(Bp)
    return pl.pallas_call(
        _lstm_recurrence_kernel,
        out_shape=jax.ShapeDtypeStruct((T, Bp, Hp), jnp.float32),
        grid=(Bp // Bt,),
        in_specs=[
            pl.BlockSpec((T, Bt, G), lambda b: (0, b, 0)),
            pl.BlockSpec((Hp, G), lambda b: (0, 0)),
            pl.BlockSpec((T, Bt, 1), lambda b: (0, b, 0)),
        ],
        out_specs=pl.BlockSpec((T, Bt, Hp), lambda b: (0, b, 0)),
        compiler_params=pltpu.CompilerParams(
            dimension_semantics=("parallel",),
            vmem_limit_bytes=_VMEM_LIMIT),
    )(xproj, whh_t, mask)


# ----------------------------- params & wrapper -------------------------------

def init_params(key, input_dim, hidden_dim, lstm_depth):
    """PyTorch-layout LSTM params: list of (w_ih, w_hh, b_ih, b_hh), gate order i,f,g,o."""
    layers = []
    s = 1.0 / float(np.sqrt(hidden_dim))
    in_dim = input_dim
    keys = jax.random.split(key, 4 * lstm_depth)
    k = 0
    for _ in range(lstm_depth):
        w_ih = jax.random.uniform(keys[k], (4 * hidden_dim, in_dim), jnp.float32, -s, s); k += 1
        w_hh = jax.random.uniform(keys[k], (4 * hidden_dim, hidden_dim), jnp.float32, -s, s); k += 1
        b_ih = jax.random.uniform(keys[k], (4 * hidden_dim,), jnp.float32, -s, s); k += 1
        b_hh = jax.random.uniform(keys[k], (4 * hidden_dim,), jnp.float32, -s, s); k += 1
        layers.append((w_ih, w_hh, b_ih, b_hh))
        in_dim = hidden_dim
    return layers


def prepare_lstm_params(lstm_params, input_dim, hidden_dim):
    """Done once at init: transpose, gate-wise pad to lane-dense layout, cast to bf16."""
    Hp = _round_up(hidden_dim, 128)
    prepped = []
    in_dim = input_dim
    for (w_ih, w_hh, b_ih, b_hh) in lstm_params:
        Dp = _round_up(in_dim, 128)
        wih = jnp.zeros((4, Hp, Dp), jnp.float32).at[:, :hidden_dim, :in_dim].set(
            w_ih.reshape(4, hidden_dim, in_dim))
        wih_t = wih.reshape(4 * Hp, Dp).T.astype(jnp.bfloat16)          # (Dp, 4Hp)
        whh = jnp.zeros((4, Hp, Hp), jnp.float32).at[:, :hidden_dim, :hidden_dim].set(
            w_hh.reshape(4, hidden_dim, hidden_dim))
        whh_t = whh.reshape(4 * Hp, Hp).T.astype(jnp.bfloat16)          # (Hp, 4Hp)
        bias = jnp.zeros((4, Hp), jnp.float32).at[:, :hidden_dim].set(
            (b_ih + b_hh).reshape(4, hidden_dim)).reshape(1, 4 * Hp)
        prepped.append((wih_t, whh_t, bias))
        in_dim = hidden_dim
    return prepped


def stacked_lstm_forward(prepped, hidden_dim, seqs, masks_np):
    """seqs: (B, T, D) float features; masks_np: list of (T,) 0/1 prefix masks.

    Returns one (B, L, H) representation per LSTM layer (L = max length),
    zero-padded past each sequence length, in the original batch order
    (the PyTorch sort / unsort around pack_padded_sequence is a value no-op).
    """
    B, T, D = seqs.shape
    lengths = np.array([int(np.sum(m)) for m in masks_np])
    L = int(lengths.max())                                  # pad_packed_sequence trims to max len
    Bp = _round_up(B, 8)
    Dp = _round_up(D, 128)
    Hp = _round_up(hidden_dim, 128)

    x = jnp.transpose(jnp.asarray(seqs, jnp.float32), (1, 0, 2))        # (T, B, D) time-major
    x = jnp.pad(x, ((0, 0), (0, Bp - B), (0, Dp - D)))                  # (T, Bp, Dp)

    mask_np = np.zeros((T, Bp, 1), np.float32)
    mask_np[:, :B, 0] = np.stack(masks_np, axis=1)                      # (T, B)
    mask = jnp.asarray(mask_np)

    reps_tm = []
    h = x
    for (wih_t, whh_t, bias) in prepped:
        xproj = gates_proj_pallas(h, wih_t, bias)        # big parallel MXU matmul
        h = lstm_recurrence_pallas(xproj, whh_t, mask)   # serial part only: h @ W_hh
        reps_tm.append(h)

    return [jnp.transpose(r, (1, 0, 2))[:B, :L, :hidden_dim] for r in reps_tm]


# -------------------------- pure-JAX reference check --------------------------
# Mirrors the kernel numerics (bf16 matmul inputs, f32 accumulation) so the
# comparison is tight.

def _lstm_layer_ref(x_tbd, mask_tb1, w_ih, w_hh, b_ih, b_hh):
    H = w_hh.shape[1]
    B = x_tbd.shape[1]
    wih_t = w_ih.T.astype(jnp.bfloat16)
    whh_t = w_hh.T.astype(jnp.bfloat16)
    bias = (b_ih + b_hh).astype(jnp.float32)
    xproj = jnp.dot(x_tbd.astype(jnp.bfloat16), wih_t,
                    preferred_element_type=jnp.float32) + bias          # (T, B, 4H)

    def step(carry, inp):
        h, c = carry
        xp, m = inp
        gates = xp + jnp.dot(h.astype(jnp.bfloat16), whh_t,
                             preferred_element_type=jnp.float32)
        i = _sigmoid(gates[:, 0 * H:1 * H])
        f = _sigmoid(gates[:, 1 * H:2 * H])
        g = jnp.tanh(gates[:, 2 * H:3 * H])
        o = _sigmoid(gates[:, 3 * H:4 * H])
        c = f * c + i * g
        h = o * jnp.tanh(c)
        return (h, c), h * m

    init = (jnp.zeros((B, H), jnp.float32), jnp.zeros((B, H), jnp.float32))
    _, out = lax.scan(step, init, (xproj, mask_tb1))
    return out


def stacked_lstm_ref(params, seqs, masks_np):
    lengths = np.array([int(np.sum(m)) for m in masks_np])
    L = int(lengths.max())
    x = jnp.transpose(jnp.asarray(seqs, jnp.float32), (1, 0, 2))        # (T, B, D)
    mask = jnp.asarray(np.stack(masks_np), jnp.float32).T[:, :, None]   # (T, B, 1)
    reps = []
    h = x
    for layer in params:
        h = _lstm_layer_ref(h, mask, *layer)
        reps.append(h)
    return [jnp.transpose(r, (1, 0, 2))[:, :L, :] for r in reps]


if __name__ == "__main__":
    input_dim, hidden_dim, lstm_depth = 32, 32, 2
    batch, seq = 2, 8

    key = jax.random.PRNGKey(0)
    pkey, skey = jax.random.split(key)
    params = init_params(pkey, input_dim, hidden_dim, lstm_depth)
    prepped = prepare_lstm_params(params, input_dim, hidden_dim)

    seqs = jax.random.normal(skey, (batch, seq, input_dim), jnp.float32) * 0.1
    lengths = [seq, 5]
    masks = [np.array([1.0] * l + [0.0] * (seq - l), dtype=np.float32) for l in lengths]

    reps = stacked_lstm_forward(prepped, hidden_dim, seqs, masks)
    jax.block_until_ready(reps)

    ref_reps = stacked_lstm_ref(params, seqs, masks)
    for got, want in zip(reps, ref_reps):
        np.testing.assert_allclose(np.asarray(got), np.asarray(want),
                                   rtol=2e-3, atol=2e-3)

    print("KERNEL_OK")
</pallas_src>

<mosaic_0001>
module attributes {stable_mosaic.version = 11 : i64} {
  func.func @_gates_proj_kernel(%arg0: i32, %arg1: memref<64x128xf32, #tpu.memory_space<vmem>>, %arg2: memref<128x512xbf16, #tpu.memory_space<vmem>>, %arg3: memref<1x512xf32, #tpu.memory_space<vmem>>, %arg4: memref<64x512xf32, #tpu.memory_space<vmem>>) attributes {dimension_semantics = [#tpu.dimension_semantics<parallel>], iteration_bounds = array<i64: 1>, scalar_prefetch = 0 : i64, scratch_operands = 0 : i64, tpu.core_type = #tpu.core_type<tc>, window_params = [{transform_indices = @transform_0, window_bounds = array<i64: 64, 128>}, {pipeline_mode = #tpu.pipeline_mode<synchronous>, transform_indices = @transform_1, window_bounds = array<i64: 128, 512>}, {pipeline_mode = #tpu.pipeline_mode<synchronous>, transform_indices = @transform_2, window_bounds = array<i64: 1, 512>}, {transform_indices = @transform_3, window_bounds = array<i64: 64, 512>}]} {
    %c0 = arith.constant 0 : index
    %c0_0 = arith.constant 0 : index
    %0 = vector.load %arg1[%c0, %c0_0] : memref<64x128xf32, #tpu.memory_space<vmem>>, vector<64x128xf32>
    %1 = arith.truncf %0 : vector<64x128xf32> to vector<64x128xbf16>
    %c0_1 = arith.constant 0 : index
    %c0_2 = arith.constant 0 : index
    %2 = vector.load %arg2[%c0_1, %c0_2] : memref<128x512xbf16, #tpu.memory_space<vmem>>, vector<128x512xbf16>
    %cst = arith.constant dense<0.000000e+00> : vector<64x512xf32>
    %3 = tpu.matmul %1, %2, %cst {dimension_numbers = #tpu.dot_dimension_numbers<[1], [0], [0], [1], [0, 0, 1, 1], [], []>} : vector<64x128xbf16>, vector<128x512xbf16>, vector<64x512xf32> -> vector<64x512xf32>
    %c0_3 = arith.constant 0 : index
    %c0_4 = arith.constant 0 : index
    %4 = vector.load %arg3[%c0_3, %c0_4] : memref<1x512xf32, #tpu.memory_space<vmem>>, vector<1x512xf32>
    %5 = vector.broadcast %4 : vector<1x512xf32> to vector<64x512xf32>
    %6 = arith.addf %3, %5 : vector<64x512xf32>
    %c0_5 = arith.constant 0 : index
    %c0_6 = arith.constant 0 : index
    %7 = vector.load %arg4[%c0_5, %c0_6] : memref<64x512xf32, #tpu.memory_space<vmem>>, vector<64x512xf32>
    tpu.vector_store %arg4[%c0_5, %c0_6], %6 {strides = array<i32>} : memref<64x512xf32, #tpu.memory_space<vmem>>, vector<64x512xf32>,
    return
  }
  func.func @transform_0(%arg0: i32) -> (i32, i32) {
    %c0_i32 = arith.constant 0 : i32
    %c0_i32_0 = arith.constant 0 : i32
    return %arg0, %c0_i32 : i32, i32
  }
  func.func @transform_1(%arg0: i32) -> (i32, i32) {
    %c0_i32 = arith.constant 0 : i32
    %c0_i32_0 = arith.constant 0 : i32
    %c0_i32_1 = arith.constant 0 : i32
    return %c0_i32, %c0_i32_0 : i32, i32
  }
  func.func @transform_2(%arg0: i32) -> (i32, i32) {
    %c0_i32 = arith.constant 0 : i32
    %c0_i32_0 = arith.constant 0 : i32
    %c0_i32_1 = arith.constant 0 : i32
    return %c0_i32, %c0_i32_0 : i32, i32
  }
  func.func @transform_3(%arg0: i32) -> (i32, i32) {
    %c0_i32 = arith.constant 0 : i32
    %c0_i32_0 = arith.constant 0 : i32
    return %arg0, %c0_i32 : i32, i32
  }
}

</mosaic_0001>

<llo_original>
// kernel: tpu_custom_call.1
$region0: #{tpu_custom_call.1}
  #allocation0 [shape = 'u32[]', space=smem, size = 0x4, offset = 0x4, fixed_abs, tag = 'smem constant byte address 0x4 - core index']
  #allocation1 [shape = 'u32[144,128]{1,0:T(1,128)}', space=vmem, size = 0x12000, scoped, tag = 'internal scratch']
  %s0 = inlined_call_operand.hbm [shape: f32[64,128], index: 0, kind: input, shape index: {}]
  %s1 = inlined_call_operand.hbm [shape: bf16[128,512], index: 1, kind: input, shape index: {}]
  %s2 = inlined_call_operand.vmem [shape: f32[1,512], index: 2, kind: input, shape index: {}]
  %s3 = inlined_call_operand.hbm [shape: f32[64,512], index: 3, kind: output, shape index: {}]
  %s4 = sld [smem:[#allocation0]]
  $region30: #{tpu_custom_call.1} parent=0
    _
  %s6 = ssub.s32 1, %s4
  %s7 = scalar_select 0, %s6, %s4
  $region1: #{tpu_custom_call.1} parent=0
    #allocation2 [shape = 'u8[32768]{0}', space=vmem, size = 0x8000, scoped, tag = 'input window, operand 0, single buffered']
    #allocation3 [shape = 's32[1]{0}', space=sflag, size = 0x4, scoped, tag = 'scoped memory for tpu_custom_call.1']
    #allocation4 [shape = 's32[1]{0}', space=sflag, size = 0x4, scoped, tag = 'scoped memory for tpu_custom_call.1']
    #allocation5 [shape = 'u8[131072]{0}', space=vmem, size = 0x20000, scoped, tag = 'input window, operand 1, single buffered']
    #allocation6 [shape = 's32[1]{0}', space=sflag, size = 0x4, scoped, tag = 'scoped memory for tpu_custom_call.1']
    #allocation7 [shape = 'u8[131072]{0}', space=vmem, size = 0x20000, scoped, tag = 'output window, operand 0, single buffered']
    %8 = vsyncpa [#allocation3], 0
    %9 = vsyncpa [#allocation6], 0
    %10 = vsyncpa [#allocation4], 0
    // Predicated region
    $region2: #{tpu_custom_call.1} parent=1 // pred_check
      _
    $region3: #{tpu_custom_call.1} parent=1 // pred_check_branch
      %12 = sbr.rel (0) target = $region5
    $region4: #{tpu_custom_call.1} parent=1 // pred_region
      %s14 = ssub.s32 1024, 1024
      %15 = vsyncadd [#allocation3], %s14
      %s16 = sshll.u32 [#allocation2], 4
      %s17 = int_to_ptr.vmem [resolvable:$true] %s16
      %22 = dma.hbm_to_vmem [thread:$0]  %s0, 1024, %s17, [#allocation3], 128, 128, 8
    $region5: #{tpu_custom_call.1} parent=1 // pred_fallthru
      _
    // Predicated region
    $region6: #{tpu_custom_call.1} parent=1 // pred_check
      _
    $region7: #{tpu_custom_call.1} parent=1 // pred_check_branch
      %24 = sbr.rel (0) target = $region9
    $region8: #{tpu_custom_call.1} parent=1 // pred_region
      %s26 = ssub.s32 4096, 4096
      %27 = vsyncadd [#allocation6], %s26
      %s28 = sshll.u32 [#allocation5], 4
      %s29 = int_to_ptr.vmem [resolvable:$true] %s28
      %34 = dma.hbm_to_vmem [thread:$0]  %s1, 4096, %s29, [#allocation6], 256, 256, 16
    $region9: #{tpu_custom_call.1} parent=1 // pred_fallthru
      _
    // Predicated region
    $region10: #{tpu_custom_call.1} parent=1 // pred_check
      _
    $region11: #{tpu_custom_call.1} parent=1 // pred_check_branch
      %36 = sbr.rel (0) target = $region13
    $region12: #{tpu_custom_call.1} parent=1 // pred_region
      _
    $region13: #{tpu_custom_call.1} parent=1 // pred_fallthru
      _
    // Predicated region
    $region14: #{tpu_custom_call.1} parent=1 // pred_check
      _
    $region15: #{tpu_custom_call.1} parent=1 // pred_check_branch
      %38 = sbr.rel (0) target = $region17
    $region16: #{tpu_custom_call.1} parent=1 // pred_region
      %39 = dma.done [#allocation3], 1024
    $region17: #{tpu_custom_call.1} parent=1 // pred_fallthru
      _
    // Predicated region
    $region18: #{tpu_custom_call.1} parent=1 // pred_check
      _
    $region19: #{tpu_custom_call.1} parent=1 // pred_check_branch
      %41 = sbr.rel (0) target = $region21
    $region20: #{tpu_custom_call.1} parent=1 // pred_region
      %42 = dma.done [#allocation6], 4096
    $region21: #{tpu_custom_call.1} parent=1 // pred_fallthru
      _
    %v44 = vld [vmem:[#allocation2] sm:$0xff]
    %v45 = vld [vmem:[#allocation2 + $0x8] sm:$0xff]
    %v46 = vld [vmem:[#allocation2 + $0x10] sm:$0xff]
    %v47 = vld [vmem:[#allocation2 + $0x18] sm:$0xff]
    %v48 = vld [vmem:[#allocation2 + $0x20] sm:$0xff]
    %v49 = vld [vmem:[#allocation2 + $0x28] sm:$0xff]
    %v50 = vld [vmem:[#allocation2 + $0x30] sm:$0xff]
    %v51 = vld [vmem:[#allocation2 + $0x38] sm:$0xff]
    %v52 = vpack.c.bf16 %v45, %v44
    %v53 = vpack.c.bf16 %v47, %v46
    %v54 = vpack.c.bf16 %v49, %v48
    %v55 = vpack.c.bf16 %v51, %v50
    %v56 = vld [vmem:[#allocation5] sm:$0xff]
    %v57 = vld [vmem:[#allocation5 + $0x8] sm:$0xff]
    %v58 = vld [vmem:[#allocation5 + $0x10] sm:$0xff]
    %v59 = vld [vmem:[#allocation5 + $0x18] sm:$0xff]
    %v60 = vld [vmem:[#allocation5 + $0x20] sm:$0xff]
    %v61 = vld [vmem:[#allocation5 + $0x28] sm:$0xff]
    %v62 = vld [vmem:[#allocation5 + $0x30] sm:$0xff]
    %v63 = vld [vmem:[#allocation5 + $0x38] sm:$0xff]
    %v64 = vld [vmem:[#allocation5 + $0x40] sm:$0xff]
    %v65 = vld [vmem:[#allocation5 + $0x48] sm:$0xff]
    %v66 = vld [vmem:[#allocation5 + $0x50] sm:$0xff]
    %v67 = vld [vmem:[#allocation5 + $0x58] sm:$0xff]
    %v68 = vld [vmem:[#allocation5 + $0x60] sm:$0xff]
    %v69 = vld [vmem:[#allocation5 + $0x68] sm:$0xff]
    %v70 = vld [vmem:[#allocation5 + $0x70] sm:$0xff]
    %v71 = vld [vmem:[#allocation5 + $0x78] sm:$0xff]
    %v72 = vld [vmem:[#allocation5 + $0x80] sm:$0xff]
    %v73 = vld [vmem:[#allocation5 + $0x88] sm:$0xff]
    %v74 = vld [vmem:[#allocation5 + $0x90] sm:$0xff]
    %v75 = vld [vmem:[#allocation5 + $0x98] sm:$0xff]
    %v76 = vld [vmem:[#allocation5 + $0xa0] sm:$0xff]
    %v77 = vld [vmem:[#allocation5 + $0xa8] sm:$0xff]
    %v78 = vld [vmem:[#allocation5 + $0xb0] sm:$0xff]
    %v79 = vld [vmem:[#allocation5 + $0xb8] sm:$0xff]
    %v80 = vld [vmem:[#allocation5 + $0xc0] sm:$0xff]
    %v81 = vld [vmem:[#allocation5 + $0xc8] sm:$0xff]
    %v82 = vld [vmem:[#allocation5 + $0xd0] sm:$0xff]
    %v83 = vld [vmem:[#allocation5 + $0xd8] sm:$0xff]
    %v84 = vld [vmem:[#allocation5 + $0xe0] sm:$0xff]
    %v85 = vld [vmem:[#allocation5 + $0xe8] sm:$0xff]
    %v86 = vld [vmem:[#allocation5 + $0xf0] sm:$0xff]
    %v87 = vld [vmem:[#allocation5 + $0xf8] sm:$0xff]
    %v88 = vld [vmem:[%s2] sm:$0xf]
    %v90 = vlaneseq
    %v91 = vshrl.u32 %v90, 7
    %v92 = vsub.s32 0, %v91
    %v93 = vrot.slane %v88, %v92
    %v94 = vlaneseq
    %v95 = vshrl.u32 %v94, 7
    %v96 = vsub.s32 1, %v95
    %v97 = vrot.slane %v88, %v96
    %v98 = vlaneseq
    %v99 = vshrl.u32 %v98, 7
    %v100 = vsub.s32 2, %v99
    %v101 = vrot.slane %v88, %v100
    %v102 = vlaneseq
    %v103 = vshrl.u32 %v102, 7
    %v104 = vsub.s32 3, %v103
    %v105 = vrot.slane %v88, %v104
    %v142 = vunpack.c.l.b16 %v56
    %v143 = vunpack.c.h.b16 %v56
    %v144 = vunpack.c.l.b16 %v57
    %v145 = vunpack.c.h.b16 %v57
    %v146 = vunpack.c.l.b16 %v58
    %v147 = vunpack.c.h.b16 %v58
    %v148 = vunpack.c.l.b16 %v59
    %v149 = vunpack.c.h.b16 %v59
    %v150 = vunpack.c.l.b16 %v60
    %v151 = vunpack.c.h.b16 %v60
    %v152 = vunpack.c.l.b16 %v61
    %v153 = vunpack.c.h.b16 %v61
    %v154 = vunpack.c.l.b16 %v62
    %v155 = vunpack.c.h.b16 %v62
    %v156 = vunpack.c.l.b16 %v63
    %v157 = vunpack.c.h.b16 %v63
    %v158 = vunpack.c.l.b16 %v64
    %v159 = vunpack.c.h.b16 %v64
    %v160 = vunpack.c.l.b16 %v65
    %v161 = vunpack.c.h.b16 %v65
    %v162 = vunpack.c.l.b16 %v66
    %v163 = vunpack.c.h.b16 %v66
    %v164 = vunpack.c.l.b16 %v67
    %v165 = vunpack.c.h.b16 %v67
    %v166 = vunpack.c.l.b16 %v68
    %v167 = vunpack.c.h.b16 %v68
    %v168 = vunpack.c.l.b16 %v69
    %v169 = vunpack.c.h.b16 %v69
    %v170 = vunpack.c.l.b16 %v70
    %v171 = vunpack.c.h.b16 %v70
    %v172 = vunpack.c.l.b16 %v71
    %v173 = vunpack.c.h.b16 %v71
    %v174 = vunpack.c.l.b16 %v72
    %v175 = vunpack.c.h.b16 %v72
    %v176 = vunpack.c.l.b16 %v73
    %v177 = vunpack.c.h.b16 %v73
    %v178 = vunpack.c.l.b16 %v74
    %v179 = vunpack.c.h.b16 %v74
    %v180 = vunpack.c.l.b16 %v75
    %v181 = vunpack.c.h.b16 %v75
    %v182 = vunpack.c.l.b16 %v76
    %v183 = vunpack.c.h.b16 %v76
    %v184 = vunpack.c.l.b16 %v77
    %v185 = vunpack.c.h.b16 %v77
    %v186 = vunpack.c.l.b16 %v78
    %v187 = vunpack.c.h.b16 %v78
    %v188 = vunpack.c.l.b16 %v79
    %v189 = vunpack.c.h.b16 %v79
    %v190 = vunpack.c.l.b16 %v80
    %v191 = vunpack.c.h.b16 %v80
    %v192 = vunpack.c.l.b16 %v81
    %v193 = vunpack.c.h.b16 %v81
    %v194 = vunpack.c.l.b16 %v82
    %v195 = vunpack.c.h.b16 %v82
    %v196 = vunpack.c.l.b16 %v83
    %v197 = vunpack.c.h.b16 %v83
    %v198 = vunpack.c.l.b16 %v84
    %v199 = vunpack.c.h.b16 %v84
    %v200 = vunpack.c.l.b16 %v85
    %v201 = vunpack.c.h.b16 %v85
    %v202 = vunpack.c.l.b16 %v86
    %v203 = vunpack.c.h.b16 %v86
    %v204 = vunpack.c.l.b16 %v87
    %v205 = vunpack.c.h.b16 %v87
    %v206 = vpack.c.b16 %v146, %v142
    %v207 = vpack.c.b16 %v147, %v143
    %v208 = vpack.c.b16 %v148, %v144
    %v209 = vpack.c.b16 %v149, %v145
    %v210 = vpack.c.b16 %v154, %v150
    %v211 = vpack.c.b16 %v155, %v151
    %v212 = vpack.c.b16 %v156, %v152
    %v213 = vpack.c.b16 %v157, %v153
    %v214 = vpack.c.b16 %v162, %v158
    %v215 = vpack.c.b16 %v163, %v159
    %v216 = vpack.c.b16 %v164, %v160
    %v217 = vpack.c.b16 %v165, %v161
    %v218 = vpack.c.b16 %v170, %v166
    %v219 = vpack.c.b16 %v171, %v167
    %v220 = vpack.c.b16 %v172, %v168
    %v221 = vpack.c.b16 %v173, %v169
    %v222 = vpack.c.b16 %v178, %v174
    %v223 = vpack.c.b16 %v179, %v175
    %v224 = vpack.c.b16 %v180, %v176
    %v225 = vpack.c.b16 %v181, %v177
    %v226 = vpack.c.b16 %v186, %v182
    %v227 = vpack.c.b16 %v187, %v183
    %v228 = vpack.c.b16 %v188, %v184
    %v229 = vpack.c.b16 %v189, %v185
    %v230 = vpack.c.b16 %v194, %v190
    %v231 = vpack.c.b16 %v195, %v191
    %v232 = vpack.c.b16 %v196, %v192
    %v233 = vpack.c.b16 %v197, %v193
    %v234 = vpack.c.b16 %v202, %v198
    %v235 = vpack.c.b16 %v203, %v199
    %v236 = vpack.c.b16 %v204, %v200
    %v237 = vpack.c.b16 %v205, %v201
    %270 = vmatprep.subr.bf16.mxu0 %v207
    %271 = vmatpush1.bf16.msra.mxu0 %v206
    %272 = vmatprep.subr.bf16.mxu0 %v211
    %273 = vmatpush1.bf16.msra.mxu0 %v210
    %274 = vmatprep.subr.bf16.mxu0 %v215
    %275 = vmatpush1.bf16.msra.mxu0 %v214
    %276 = vmatprep.subr.bf16.mxu0 %v219
    %277 = vmatpush1.bf16.msra.mxu0 %v218
    %278 = vmatprep.subr.bf16.mxu0 %v223
    %279 = vmatpush1.bf16.msra.mxu0 %v222
    %280 = vmatprep.subr.bf16.mxu0 %v227
    %281 = vmatpush1.bf16.msra.mxu0 %v226
    %282 = vmatprep.subr.bf16.mxu0 %v231
    %283 = vmatpush1.bf16.msra.mxu0 %v230
    %284 = vmatprep.subr.bf16.mxu0 %v235
    %285 = vmatpush1.bf16.msra.mxu0 %v234
    %286 = vmatprep.subr.bf16.mxu0 0
    %287 = vmatpush1.bf16.msra.mxu0 0
    %288 = vmatprep.subr.bf16.mxu0 0
    %289 = vmatpush1.bf16.msra.mxu0 0
    %290 = vmatprep.subr.bf16.mxu0 0
    %291 = vmatpush1.bf16.msra.mxu0 0
    %292 = vmatprep.subr.bf16.mxu0 0
    %293 = vmatpush1.bf16.msra.mxu0 0
    %294 = vmatprep.subr.bf16.mxu0 0
    %295 = vmatpush1.bf16.msra.mxu0 0
    %296 = vmatprep.subr.bf16.mxu0 0
    %297 = vmatpush1.bf16.msra.mxu0 0
    %298 = vmatprep.subr.bf16.mxu0 0
    %299 = vmatpush1.bf16.msra.mxu0 0
    %300 = vmatprep.subr.bf16.mxu0 0
    %301 = vmatpush1.bf16.msra.mxu0 0
    %302 = vmatprep.mubr.bf16.mxu0 0
    %303 = vmatmul.mubr.bf16.gmra.mrb[0].mxu0 %v52
    %v304 = vpop.f32.mrb[0].mxu0
    %v305 = vadd.f32 %v93, %v304
    %v306 = vpop.f32.mrb[0].mxu0
    %v307 = vadd.f32 %v97, %v306
    %v308 = vpop.f32.mrb[0].mxu0
    %v309 = vadd.f32 %v93, %v308
    %v310 = vpop.f32.mrb[0].mxu0
    %v311 = vadd.f32 %v97, %v310
    %312 = vmatprep.mubr.bf16.mxu0 0
    %313 = vmatmul.mubr.bf16.gmra.mrb[0].mxu0 %v53
    %v314 = vpop.f32.mrb[0].mxu0
    %v315 = vadd.f32 %v93, %v314
    %v316 = vpop.f32.mrb[0].mxu0
    %v317 = vadd.f32 %v97, %v316
    %v318 = vpop.f32.mrb[0].mxu0
    %v319 = vadd.f32 %v93, %v318
    %v320 = vpop.f32.mrb[0].mxu0
    %v321 = vadd.f32 %v97, %v320
    %322 = vmatprep.mubr.bf16.mxu0 0
    %323 = vmatmul.mubr.bf16.gmra.mrb[0].mxu0 %v54
    %v324 = vpop.f32.mrb[0].mxu0
    %v325 = vadd.f32 %v93, %v324
    %v326 = vpop.f32.mrb[0].mxu0
    %v327 = vadd.f32 %v97, %v326
    %v328 = vpop.f32.mrb[0].mxu0
    %v329 = vadd.f32 %v93, %v328
    %v330 = vpop.f32.mrb[0].mxu0
    %v331 = vadd.f32 %v97, %v330
    %332 = vmatprep.mubr.bf16.mxu0 0
    %333 = vmatmul.mubr.bf16.gmra.mrb[0].mxu0 %v55
    %v334 = vpop.f32.mrb[0].mxu0
    %v335 = vadd.f32 %v93, %v334
    %v336 = vpop.f32.mrb[0].mxu0
    %v337 = vadd.f32 %v97, %v336
    %v338 = vpop.f32.mrb[0].mxu0
    %v339 = vadd.f32 %v93, %v338
    %v340 = vpop.f32.mrb[0].mxu0
    %v341 = vadd.f32 %v97, %v340
    %342 = vdwg.mxu0
    %343 = vmatprep.subr.bf16.mxu0 %v209
    %344 = vmatpush1.bf16.msra.mxu0 %v208
    %345 = vmatprep.subr.bf16.mxu0 %v213
    %346 = vmatpush1.bf16.msra.mxu0 %v212
    %347 = vmatprep.subr.bf16.mxu0 %v217
    %348 = vmatpush1.bf16.msra.mxu0 %v216
    %349 = vmatprep.subr.bf16.mxu0 %v221
    %350 = vmatpush1.bf16.msra.mxu0 %v220
    %351 = vmatprep.subr.bf16.mxu0 %v225
    %352 = vmatpush1.bf16.msra.mxu0 %v224
    %353 = vmatprep.subr.bf16.mxu0 %v229
    %354 = vmatpush1.bf16.msra.mxu0 %v228
    %355 = vmatprep.subr.bf16.mxu0 %v233
    %356 = vmatpush1.bf16.msra.mxu0 %v232
    %357 = vmatprep.subr.bf16.mxu0 %v237
    %358 = vmatpush1.bf16.msra.mxu0 %v236
    %359 = vmatprep.subr.bf16.mxu0 0
    %360 = vmatpush1.bf16.msra.mxu0 0
    %361 = vmatprep.subr.bf16.mxu0 0
    %362 = vmatpush1.bf16.msra.mxu0 0
    %363 = vmatprep.subr.bf16.mxu0 0
    %364 = vmatpush1.bf16.msra.mxu0 0
    %365 = vmatprep.subr.bf16.mxu0 0
    %366 = vmatpush1.bf16.msra.mxu0 0
    %367 = vmatprep.subr.bf16.mxu0 0
    %368 = vmatpush1.bf16.msra.mxu0 0
    %369 = vmatprep.subr.bf16.mxu0 0
    %370 = vmatpush1.bf16.msra.mxu0 0
    %371 = vmatprep.subr.bf16.mxu0 0
    %372 = vmatpush1.bf16.msra.mxu0 0
    %373 = vmatprep.subr.bf16.mxu0 0
    %374 = vmatpush1.bf16.msra.mxu0 0
    %375 = vmatprep.mubr.bf16.mxu0 0
    %376 = vmatmul.mubr.bf16.gmra.mrb[0].mxu0 %v52
    %v377 = vpop.f32.mrb[0].mxu0
    %v378 = vadd.f32 %v101, %v377
    %v379 = vpop.f32.mrb[0].mxu0
    %v380 = vadd.f32 %v105, %v379
    %v381 = vpop.f32.mrb[0].mxu0
    %v382 = vadd.f32 %v101, %v381
    %v383 = vpop.f32.mrb[0].mxu0
    %v384 = vadd.f32 %v105, %v383
    %385 = vmatprep.mubr.bf16.mxu0 0
    %386 = vmatmul.mubr.bf16.gmra.mrb[0].mxu0 %v53
    %v387 = vpop.f32.mrb[0].mxu0
    %v388 = vadd.f32 %v101, %v387
    %v389 = vpop.f32.mrb[0].mxu0
    %v390 = vadd.f32 %v105, %v389
    %v391 = vpop.f32.mrb[0].mxu0
    %v392 = vadd.f32 %v101, %v391
    %v393 = vpop.f32.mrb[0].mxu0
    %v394 = vadd.f32 %v105, %v393
    %395 = vmatprep.mubr.bf16.mxu0 0
    %396 = vmatmul.mubr.bf16.gmra.mrb[0].mxu0 %v54
    %v397 = vpop.f32.mrb[0].mxu0
    %v398 = vadd.f32 %v101, %v397
    %v399 = vpop.f32.mrb[0].mxu0
    %v400 = vadd.f32 %v105, %v399
    %v401 = vpop.f32.mrb[0].mxu0
    %v402 = vadd.f32 %v101, %v401
    %v403 = vpop.f32.mrb[0].mxu0
    %v404 = vadd.f32 %v105, %v403
    %405 = vmatprep.mubr.bf16.mxu0 0
    %406 = vmatmul.mubr.bf16.gmra.mrb[0].mxu0 %v55
    %v407 = vpop.f32.mrb[0].mxu0
    %v408 = vadd.f32 %v101, %v407
    %v409 = vpop.f32.mrb[0].mxu0
    %v410 = vadd.f32 %v105, %v409
    %v411 = vpop.f32.mrb[0].mxu0
    %v412 = vadd.f32 %v101, %v411
    %v413 = vpop.f32.mrb[0].mxu0
    %v414 = vadd.f32 %v105, %v413
    %415 = vdwg.mxu0
    %416 = vst [vmem:[#allocation7] sm:$0xff] %v305
    %417 = vst [vmem:[#allocation7 + $0x8] sm:$0xff] %v307
    %418 = vst [vmem:[#allocation7 + $0x10] sm:$0xff] %v378
    %419 = vst [vmem:[#allocation7 + $0x18] sm:$0xff] %v380
    %420 = vst [vmem:[#allocation7 + $0x20] sm:$0xff] %v309
    %421 = vst [vmem:[#allocation7 + $0x28] sm:$0xff] %v311
    %422 = vst [vmem:[#allocation7 + $0x30] sm:$0xff] %v382
    %423 = vst [vmem:[#allocation7 + $0x38] sm:$0xff] %v384
    %424 = vst [vmem:[#allocation7 + $0x40] sm:$0xff] %v315
    %425 = vst [vmem:[#allocation7 + $0x48] sm:$0xff] %v317
    %426 = vst [vmem:[#allocation7 + $0x50] sm:$0xff] %v388
    %427 = vst [vmem:[#allocation7 + $0x58] sm:$0xff] %v390
    %428 = vst [vmem:[#allocation7 + $0x60] sm:$0xff] %v319
    %429 = vst [vmem:[#allocation7 + $0x68] sm:$0xff] %v321
    %430 = vst [vmem:[#allocation7 + $0x70] sm:$0xff] %v392
    %431 = vst [vmem:[#allocation7 + $0x78] sm:$0xff] %v394
    %432 = vst [vmem:[#allocation7 + $0x80] sm:$0xff] %v325
    %433 = vst [vmem:[#allocation7 + $0x88] sm:$0xff] %v327
    %434 = vst [vmem:[#allocation7 + $0x90] sm:$0xff] %v398
    %435 = vst [vmem:[#allocation7 + $0x98] sm:$0xff] %v400
    %436 = vst [vmem:[#allocation7 + $0xa0] sm:$0xff] %v329
    %437 = vst [vmem:[#allocation7 + $0xa8] sm:$0xff] %v331
    %438 = vst [vmem:[#allocation7 + $0xb0] sm:$0xff] %v402
    %439 = vst [vmem:[#allocation7 + $0xb8] sm:$0xff] %v404
    %440 = vst [vmem:[#allocation7 + $0xc0] sm:$0xff] %v335
    %441 = vst [vmem:[#allocation7 + $0xc8] sm:$0xff] %v337
    %442 = vst [vmem:[#allocation7 + $0xd0] sm:$0xff] %v408
    %443 = vst [vmem:[#allocation7 + $0xd8] sm:$0xff] %v410
    %444 = vst [vmem:[#allocation7 + $0xe0] sm:$0xff] %v339
    %445 = vst [vmem:[#allocation7 + $0xe8] sm:$0xff] %v341
    %446 = vst [vmem:[#allocation7 + $0xf0] sm:$0xff] %v412
    %447 = vst [vmem:[#allocation7 + $0xf8] sm:$0xff] %v414
    // Predicated region
    $region22: #{tpu_custom_call.1} parent=1 // pred_check
      _
    $region23: #{tpu_custom_call.1} parent=1 // pred_check_branch
      %449 = sbr.rel (0) target = $region25
    $region24: #{tpu_custom_call.1} parent=1 // pred_region
      %s451 = ssub.s32 4096, 4096
      %452 = vsyncadd [#allocation4], %s451
      %s453 = sshll.u32 [#allocation7], 4
      %s454 = int_to_ptr.vmem [resolvable:$true] %s453
      %459 = dma.vmem_to_hbm [thread:$0]  %s454, 4096, %s3, [#allocation4], 512, 512, 32
    $region25: #{tpu_custom_call.1} parent=1 // pred_fallthru
      _
    // Predicated region
    $region26: #{tpu_custom_call.1} parent=1 // pred_check
      _
    $region27: #{tpu_custom_call.1} parent=1 // pred_check_branch
      %461 = sbr.rel (0) target = $region29
    $region28: #{tpu_custom_call.1} parent=1 // pred_region
      %462 = dma.done [#allocation4], 4096
    $region29: #{tpu_custom_call.1} parent=1 // pred_fallthru
      _
    %463 = vsyncpa [#allocation3], 1
    %464 = vsyncpa [#allocation6], 1
    %465 = vsyncpa [#allocation4], 1

</llo_original>
